<compile_context>
chip_gen: v7x
topology: tpu7x:2x2x1
jax: 0.10.0
libtpu: 0.0.40
codegen_flags: <defaults>
</compile_context>

<pallas_src>
import jax
import jax.numpy as jnp
from jax.experimental import pallas as pl
from jax.experimental.pallas import tpu as pltpu

EPS = 1e-4

_LANE_CANDIDATES = (4096, 2048, 1024, 512, 384, 256, 128)  # lane-dense widths
_MAX_FALLBACK_LANE = 8192            # cap for the odd-size suffix-product lane
_TARGET_TILE_BYTES = 4 * 1024 * 1024             # ~4 MiB per pipeline buffer
_BALANCE_THRESHOLD_BYTES = 4 * 1024 * 1024       # force even >=4 steps above this


def _cdiv(a, b):
    return -(-a // b)


def _physical_vmem_bytes():
    """Best-effort physical VMEM per core; conservative 64 MiB (v7x) fallback."""
    phys = 64 * 1024 * 1024
    try:
        info_fn = getattr(pltpu, "get_tpu_info", None)
        if info_fn is not None:
            info = info_fn()
            phys = int(getattr(info, "vmem_capacity_bytes", phys)) or phys
    except Exception:
        pass
    return phys


def _choose_lane(total, shape):
    """Lane width for the free (rows, lane) flat view.

    Prefer a large 128-multiple that divides `total` (lane-dense, unmasked
    stores). Otherwise (odd totals) use the largest trailing-dims product
    <= _MAX_FALLBACK_LANE: still a free reshape, and the block always covers
    the full lane dim so no pad/slice is ever needed.
    """
    for cand in _LANE_CANDIDATES:
        if total % cand == 0:
            return cand
    lane = shape[-1]
    prod = 1
    for d in reversed(shape):
        prod *= d
        if prod <= _MAX_FALLBACK_LANE:
            lane = prod
        else:
            break
    return lane


def _choose_row_tile(rows, lane, itemsize, n_feat, vmem_cap):
    """Row tile (multiple of 8, or == rows) and grid-step count.

    Targets ~_TARGET_TILE_BYTES per buffer bounded by the generation's VMEM
    budget; for non-tiny features also aims for an EVEN step count >= 4 so a
    "parallel" grid keeps both v7x TensorCores busy and balanced.
    """
    bytes_per_row = lane * itemsize
    feat_bytes = rows * bytes_per_row

    # Per-element VMEM cost: (n_feat inputs + 1 output) double-buffered at the
    # I/O dtype, plus ~3 f32 block temporaries the compiler may materialize.
    per_elem = (n_feat + 1) * 2 * itemsize + 3 * 4
    max_tile_elems = max(8 * lane, (vmem_cap - (2 << 20)) // per_elem)
    tile_elems = min(_TARGET_TILE_BYTES // itemsize, max_tile_elems)

    tm = max(8, (tile_elems // lane) // 8 * 8)
    if tm >= rows:
        tm = rows
    steps = _cdiv(rows, tm)

    if (feat_bytes >= _BALANCE_THRESHOLD_BYTES and rows > 8
            and (steps < 4 or steps % 2)):
        start = max(4, steps + (steps % 2))
        for s in range(start, start + 128, 2):
            cand = max(8, _cdiv(_cdiv(rows, s), 8) * 8)
            if cand >= rows:
                continue
            actual = _cdiv(rows, cand)
            if actual >= 4 and actual % 2 == 0:
                tm, steps = cand, actual
                break
    return tm, steps


def _make_kernel(n_feat):
    def kernel(w_ref, *refs):
        feat_refs = refs[:n_feat]
        o_ref = refs[n_feat]
        # Normalized fusion weights on the scalar path (SMEM -> sregs).
        w = [jnp.maximum(w_ref[i], 0.0) for i in range(n_feat)]
        total = w[0]
        for wi in w[1:]:
            total = total + wi
        inv = 1.0 / (total + EPS)
        # Accumulate in f32 regardless of I/O dtype (bf16-safe, incl. v5e).
        fused = feat_refs[0][...].astype(jnp.float32) * (w[0] * inv)
        for i in range(1, n_feat):
            fused = fused + feat_refs[i][...].astype(jnp.float32) * (w[i] * inv)
        o_ref[...] = jnp.maximum(fused, 0.0).astype(o_ref.dtype)  # act = relu
    return kernel


def fast_normalized_fusion(weights, *features):
    """weights: (in_nodes,) f32; features: in_nodes same-shape (e.g. NCHW) arrays."""
    n_feat = len(features)
    assert n_feat in (2, 3), "FastNormalizedFusion supports 2 or 3 inputs"
    assert weights.shape == (n_feat,)
    shape = features[0].shape
    assert all(f.shape == shape for f in features), "feature shapes must match"

    # PyTorch type-promotes across mixed-dtype features; do it explicitly.
    # (Rare path: a mismatched feature costs one extra HBM pass for the cast.)
    dtype = jnp.result_type(*features)
    features = tuple(f if f.dtype == dtype else f.astype(dtype) for f in features)
    itemsize = jnp.dtype(dtype).itemsize

    total = 1
    for d in shape:
        total *= d

    # Free (bitcast) flat view: (rows, lane). No pad, no output slice.
    # NOTE: assumes the producer hands back default row-major layout; a
    # non-default layout upstream would hide a relayout copy here — fix at the
    # producer, not in this wrapper.
    lane = _choose_lane(total, shape)
    rows = total // lane
    flat = [f.reshape(rows, lane) for f in features]

    vmem_cap = (_physical_vmem_bytes() * 3) // 4          # ~75% of physical
    tm, steps = _choose_row_tile(rows, lane, itemsize, n_feat, vmem_cap)

    feat_spec = pl.BlockSpec((tm, lane), lambda i: (i, 0))
    # TODO(synk): sweep pipeline_mode=pl.Buffered(3) on the input specs if
    # profiling shows exposed DMA at step boundaries.

    out = pl.pallas_call(
        _make_kernel(n_feat),
        out_shape=jax.ShapeDtypeStruct((rows, lane), dtype),
        grid=(steps,),
        in_specs=[pl.BlockSpec(memory_space=pltpu.MemorySpace.SMEM)]
                 + [feat_spec] * n_feat,
        out_specs=feat_spec,
        compiler_params=pltpu.CompilerParams(
            dimension_semantics=("parallel",),
            vmem_limit_bytes=int(vmem_cap),
        ),
    )(weights.astype(jnp.float32), *flat)

    return out.reshape(shape)


def _reference(weights, *features):
    w = jnp.maximum(weights, 0.0)
    w = w / (w.sum() + EPS)
    fused = sum(f * wi for f, wi in zip(features, w))
    return jnp.maximum(fused, 0.0)


# TODO(synk): original module supports arbitrary `get_activation`; only 'relu'
# (the RT-DETR default) is implemented here.

if __name__ == "__main__":
    key = jax.random.PRNGKey(0)
    keys = jax.random.split(key, 6)

    # Case 1: canonical 2-input fusion, small NCHW, default init weights (ones).
    w2 = jnp.ones((2,), dtype=jnp.float32)
    f0 = jax.random.normal(keys[0], (2, 4, 16, 16), dtype=jnp.float32)
    f1 = jax.random.normal(keys[1], (2, 4, 16, 16), dtype=jnp.float32)
    out = jax.block_until_ready(fast_normalized_fusion(w2, f0, f1))
    ref = _reference(w2, f0, f1)
    assert out.shape == f0.shape
    assert jnp.allclose(out, ref, atol=1e-5, rtol=1e-5), "2-input mismatch"

    # Case 2: 3-input fusion, non-trivial weights (relu clips the negative one).
    w3 = jnp.array([0.3, 1.7, -0.5], dtype=jnp.float32)
    g0 = jax.random.normal(keys[2], (2, 4, 16, 16), dtype=jnp.float32)
    g1 = jax.random.normal(keys[3], (2, 4, 16, 16), dtype=jnp.float32)
    g2 = jax.random.normal(keys[4], (2, 4, 16, 16), dtype=jnp.float32)
    out3 = jax.block_until_ready(fast_normalized_fusion(w3, g0, g1, g2))
    ref3 = _reference(w3, g0, g1, g2)
    assert jnp.allclose(out3, ref3, atol=1e-5, rtol=1e-5), "3-input mismatch"

    # Case 3: larger shape -> multi-step balanced grid with a ragged last block.
    h0 = jax.random.normal(keys[5], (8, 132, 32, 32), dtype=jnp.float32)
    h1 = jax.random.normal(keys[0], (8, 132, 32, 32), dtype=jnp.float32)
    outl = jax.block_until_ready(fast_normalized_fusion(w2, h0, h1))
    refl = _reference(w2, h0, h1)
    assert jnp.allclose(outl, refl, atol=1e-5, rtol=1e-5), "tiled mismatch"

    # Case 4: odd total (no 128-multiple divisor -> suffix-product lane) + bf16 I/O.
    b0 = jax.random.normal(keys[1], (2, 3, 5, 5), dtype=jnp.bfloat16)
    b1 = jax.random.normal(keys[2], (2, 3, 5, 5), dtype=jnp.bfloat16)
    outb = jax.block_until_ready(fast_normalized_fusion(w2, b0, b1))
    refb = _reference(w2, b0.astype(jnp.float32), b1.astype(jnp.float32))
    assert jnp.allclose(outb.astype(jnp.float32), refb, atol=2e-2, rtol=2e-2), \
        "bf16 mismatch"

    print("KERNEL_OK")
</pallas_src>

<mosaic_0001>
module attributes {stable_mosaic.version = 11 : i64} {
  func.func @kernel(%arg0: i32, %arg1: memref<2xf32, #tpu.memory_space<smem>>, %arg2: memref<1x2048xf32, #tpu.memory_space<vmem>>, %arg3: memref<1x2048xf32, #tpu.memory_space<vmem>>, %arg4: memref<1x2048xf32, #tpu.memory_space<vmem>>) attributes {dimension_semantics = [#tpu.dimension_semantics<parallel>], iteration_bounds = array<i64: 1>, scalar_prefetch = 0 : i64, scratch_operands = 0 : i64, tpu.core_type = #tpu.core_type<tc>, window_params = [{transform_indices = @transform_0, window_bounds = array<i64: 2>}, {transform_indices = @transform_1, window_bounds = array<i64: 1, 2048>}, {transform_indices = @transform_2, window_bounds = array<i64: 1, 2048>}, {transform_indices = @transform_3, window_bounds = array<i64: 1, 2048>}]} {
    %c0 = arith.constant 0 : index
    %0 = memref.load %arg1[%c0] : memref<2xf32, #tpu.memory_space<smem>>
    %cst = arith.constant 0.000000e+00 : f32
    %1 = arith.maximumf %0, %cst : f32
    %c1 = arith.constant 1 : index
    %2 = memref.load %arg1[%c1] : memref<2xf32, #tpu.memory_space<smem>>
    %cst_0 = arith.constant 0.000000e+00 : f32
    %3 = arith.maximumf %2, %cst_0 : f32
    %4 = arith.addf %1, %3 : f32
    %cst_1 = arith.constant 9.99999974E-5 : f32
    %5 = arith.addf %4, %cst_1 : f32
    %cst_2 = arith.constant 1.000000e+00 : f32
    %6 = arith.divf %cst_2, %5 : f32
    %c0_3 = arith.constant 0 : index
    %c0_4 = arith.constant 0 : index
    %7 = vector.load %arg2[%c0_3, %c0_4] : memref<1x2048xf32, #tpu.memory_space<vmem>>, vector<1x2048xf32>
    %8 = arith.mulf %1, %6 : f32
    %9 = vector.broadcast %8 : f32 to vector<1x2048xf32>
    %10 = arith.mulf %7, %9 : vector<1x2048xf32>
    %c0_5 = arith.constant 0 : index
    %c0_6 = arith.constant 0 : index
    %11 = vector.load %arg3[%c0_5, %c0_6] : memref<1x2048xf32, #tpu.memory_space<vmem>>, vector<1x2048xf32>
    %12 = arith.mulf %3, %6 : f32
    %13 = vector.broadcast %12 : f32 to vector<1x2048xf32>
    %14 = arith.mulf %11, %13 : vector<1x2048xf32>
    %15 = arith.addf %10, %14 : vector<1x2048xf32>
    %cst_7 = arith.constant 0.000000e+00 : f32
    %16 = vector.broadcast %cst_7 : f32 to vector<1x2048xf32>
    %17 = arith.maximumf %15, %16 : vector<1x2048xf32>
    %c0_8 = arith.constant 0 : index
    %c0_9 = arith.constant 0 : index
    %18 = vector.load %arg4[%c0_8, %c0_9] : memref<1x2048xf32, #tpu.memory_space<vmem>>, vector<1x2048xf32>
    tpu.vector_store %arg4[%c0_8, %c0_9], %17 {strides = array<i32>} : memref<1x2048xf32, #tpu.memory_space<vmem>>, vector<1x2048xf32>,
    return
  }
  func.func @transform_0(%arg0: i32) -> i32 {
    %c0_i32 = arith.constant 0 : i32
    %c0_i32_0 = arith.constant 0 : i32
    return %c0_i32 : i32
  }
  func.func @transform_1(%arg0: i32) -> (i32, i32) {
    %c0_i32 = arith.constant 0 : i32
    %c0_i32_0 = arith.constant 0 : i32
    return %arg0, %c0_i32 : i32, i32
  }
  func.func @transform_2(%arg0: i32) -> (i32, i32) {
    %c0_i32 = arith.constant 0 : i32
    %c0_i32_0 = arith.constant 0 : i32
    return %arg0, %c0_i32 : i32, i32
  }
  func.func @transform_3(%arg0: i32) -> (i32, i32) {
    %c0_i32 = arith.constant 0 : i32
    %c0_i32_0 = arith.constant 0 : i32
    return %arg0, %c0_i32 : i32, i32
  }
}

</mosaic_0001>

<llo_original>
// kernel: tpu_custom_call.1
$region0: #{tpu_custom_call.1}
  #allocation0 [shape = 'u32[]', space=smem, size = 0x4, offset = 0x4, fixed_abs, tag = 'smem constant byte address 0x4 - core index']
  #allocation1 [shape = 'u32[144,128]{1,0:T(1,128)}', space=vmem, size = 0x12000, scoped, tag = 'internal scratch']
  %s0 = inlined_call_operand.hbm [shape: f32[2], index: 0, kind: input, shape index: {}]
  %s1 = inlined_call_operand.hbm [shape: f32[1,2048], index: 1, kind: input, shape index: {}]
  %s2 = inlined_call_operand.hbm [shape: f32[1,2048], index: 2, kind: input, shape index: {}]
  %s3 = inlined_call_operand.hbm [shape: f32[1,2048], index: 3, kind: output, shape index: {}]
  %s4 = sld [smem:[#allocation0]]
  $region34: #{tpu_custom_call.1} parent=0
    _
  %s6 = ssub.s32 1, %s4
  %s7 = scalar_select 0, %s6, %s4
  $region1: #{tpu_custom_call.1} parent=0
    #allocation2 [shape = 'u8[512]{0}', space=smem, size = 0x200, scoped, tag = 'input window, operand 0, single buffered']
    #allocation3 [shape = 's32[1]{0}', space=sflag, size = 0x4, scoped, tag = 'scoped memory for tpu_custom_call.1']
    #allocation4 [shape = 's32[1]{0}', space=sflag, size = 0x4, scoped, tag = 'scoped memory for tpu_custom_call.1']
    #allocation5 [shape = 's32[1]{0}', space=sflag, size = 0x4, scoped, tag = 'scoped memory for tpu_custom_call.1']
    #allocation6 [shape = 'u8[8192]{0}', space=vmem, size = 0x2000, scoped, tag = 'input window, operand 1, single buffered']
    #allocation7 [shape = 'u8[8192]{0}', space=vmem, size = 0x2000, scoped, tag = 'input window, operand 2, single buffered']
    #allocation8 [shape = 's32[1]{0}', space=sflag, size = 0x4, scoped, tag = 'scoped memory for tpu_custom_call.1']
    #allocation9 [shape = 'u8[8192]{0}', space=vmem, size = 0x2000, scoped, tag = 'output window, operand 0, single buffered']
    %8 = vsyncpa [#allocation5], 0
    %9 = vsyncpa [#allocation3], 0
    %10 = vsyncpa [#allocation8], 0
    %11 = vsyncpa [#allocation4], 0
    // Predicated region
    $region2: #{tpu_custom_call.1} parent=1 // pred_check
      _
    $region3: #{tpu_custom_call.1} parent=1 // pred_check_branch
      %13 = sbr.rel (0) target = $region5
    $region4: #{tpu_custom_call.1} parent=1 // pred_region
      %s15 = ssub.s32 16, 16
      %16 = vsyncadd [#allocation5], %s15
      %19 = dma.hbm_to_smem %s0, 16, [#allocation2], [#allocation5]
    $region5: #{tpu_custom_call.1} parent=1 // pred_fallthru
      _
    // Predicated region
    $region6: #{tpu_custom_call.1} parent=1 // pred_check
      _
    $region7: #{tpu_custom_call.1} parent=1 // pred_check_branch
      %21 = sbr.rel (0) target = $region9
    $region8: #{tpu_custom_call.1} parent=1 // pred_region
      %s23 = ssub.s32 256, 256
      %24 = vsyncadd [#allocation3], %s23
      %s26 = sshll.u32 [#allocation6], 4
      %s27 = int_to_ptr.vmem [resolvable:$true] %s26
      %29 = dma.hbm_to_vmem [thread:$0]  %s1, 256, %s27, [#allocation3]
    $region9: #{tpu_custom_call.1} parent=1 // pred_fallthru
      _
    // Predicated region
    $region10: #{tpu_custom_call.1} parent=1 // pred_check
      _
    $region11: #{tpu_custom_call.1} parent=1 // pred_check_branch
      %31 = sbr.rel (0) target = $region13
    $region12: #{tpu_custom_call.1} parent=1 // pred_region
      %s33 = ssub.s32 256, 256
      %34 = vsyncadd [#allocation8], %s33
      %s36 = sshll.u32 [#allocation7], 4
      %s37 = int_to_ptr.vmem [resolvable:$true] %s36
      %39 = dma.hbm_to_vmem [thread:$0]  %s2, 256, %s37, [#allocation8]
    $region13: #{tpu_custom_call.1} parent=1 // pred_fallthru
      _
    // Predicated region
    $region14: #{tpu_custom_call.1} parent=1 // pred_check
      _
    $region15: #{tpu_custom_call.1} parent=1 // pred_check_branch
      %41 = sbr.rel (0) target = $region17
    $region16: #{tpu_custom_call.1} parent=1 // pred_region
      %42 = dma.done [#allocation5], 16
    $region17: #{tpu_custom_call.1} parent=1 // pred_fallthru
      _
    // Predicated region
    $region18: #{tpu_custom_call.1} parent=1 // pred_check
      _
    $region19: #{tpu_custom_call.1} parent=1 // pred_check_branch
      %44 = sbr.rel (0) target = $region21
    $region20: #{tpu_custom_call.1} parent=1 // pred_region
      %45 = dma.done [#allocation3], 256
    $region21: #{tpu_custom_call.1} parent=1 // pred_fallthru
      _
    // Predicated region
    $region22: #{tpu_custom_call.1} parent=1 // pred_check
      _
    $region23: #{tpu_custom_call.1} parent=1 // pred_check_branch
      %47 = sbr.rel (0) target = $region25
    $region24: #{tpu_custom_call.1} parent=1 // pred_region
      %48 = dma.done [#allocation8], 256
    $region25: #{tpu_custom_call.1} parent=1 // pred_fallthru
      _
    %49 = sfence
    %s50 = sld [smem:[#allocation2]]
    %s51 = smax.f32 %s50, 0.0
    %s52 = sld [smem:[#allocation2 + $0x1]]
    %s53 = smax.f32 %s52, 0.0
    %s54 = sadd.f32 %s51, %s53
    %s55 = sadd.f32 %s54, 0.0001
    %v56 = vstv %s55
    %v57 = vrcp.pop %v56
    %s58 = vtos %v57
    %v59 = vld [vmem:[#allocation6] sm:$0xff]
    %v60 = vld [vmem:[#allocation6 + $0x8] sm:$0xff]
    %s61 = smul.f32 %s51, %s58
    %v62 = vstv %s61
    %v63 = vmul.f32 %v59, %v62
    %v64 = vmul.f32 %v60, %v62
    %v65 = vld [vmem:[#allocation7] sm:$0xff]
    %v66 = vld [vmem:[#allocation7 + $0x8] sm:$0xff]
    %s67 = smul.f32 %s53, %s58
    %v68 = vstv %s67
    %v69 = vmul.f32 %v65, %v68
    %v70 = vmul.f32 %v66, %v68
    %v71 = vadd.f32 %v63, %v69
    %v72 = vadd.f32 %v64, %v70
    %v73 = vmax.f32 %v71, 0.0
    %v74 = vmax.f32 %v72, 0.0
    %75 = vst [vmem:[#allocation9] sm:$0xff] %v73
    %76 = vst [vmem:[#allocation9 + $0x8] sm:$0xff] %v74
    // Predicated region
    $region26: #{tpu_custom_call.1} parent=1 // pred_check
      _
    $region27: #{tpu_custom_call.1} parent=1 // pred_check_branch
      %78 = sbr.rel (0) target = $region29
    $region28: #{tpu_custom_call.1} parent=1 // pred_region
      %s80 = ssub.s32 256, 256
      %81 = vsyncadd [#allocation4], %s80
      %s83 = sshll.u32 [#allocation9], 4
      %s84 = int_to_ptr.vmem [resolvable:$true] %s83
      %86 = dma.vmem_to_hbm [thread:$0]  %s84, 256, %s3, [#allocation4]
    $region29: #{tpu_custom_call.1} parent=1 // pred_fallthru
      _
    // Predicated region
    $region30: #{tpu_custom_call.1} parent=1 // pred_check
      _
    $region31: #{tpu_custom_call.1} parent=1 // pred_check_branch
      %88 = sbr.rel (0) target = $region33
    $region32: #{tpu_custom_call.1} parent=1 // pred_region
      %89 = dma.done [#allocation4], 256
    $region33: #{tpu_custom_call.1} parent=1 // pred_fallthru
      _
    %90 = vsyncpa [#allocation3], 1
    %91 = vsyncpa [#allocation8], 1
    %92 = vsyncpa [#allocation4], 1
    %93 = vsyncpa [#allocation5], 1

</llo_original>
